<compile_context>
chip_gen: v5e
topology: v5e:2x2
jax: 0.10.0
libtpu: 0.0.40
codegen_flags: <defaults>
</compile_context>

<pallas_src>
import functools

import jax
import jax.numpy as jnp
from jax import lax
from jax.experimental import pallas as pl
from jax.experimental.pallas import tpu as pltpu

LANES = 128
# ~2 MiB per input per pipeline buffer -> 4096 rows (f32) / 8192 rows (bf16).
TARGET_TILE_BYTES = 2 * 1024 * 1024


def _cdiv(a, b):
    return -(-a // b)


def _round_up(a, b):
    return _cdiv(a, b) * b


def _tensorcores_per_chip():
    """Best-effort TensorCore count addressable by a single pallas_call."""
    try:
        kind = jax.devices()[0].device_kind.lower()
    except Exception:
        return 1
    # v7x exposes two TensorCores per chip to one pallas_call; v5e / v6e have
    # a single TensorCore, where the extra slice would only add redundant work.
    return 2 if "v7" in kind else 1


def _charbonnier_kernel(x_ref, y_ref, o_ref, acc_ref, *,
                        eps, total_rows, rpt, sps):
    c = pl.program_id(0)   # slice (TensorCore) index      -- parallel axis
    j = pl.program_id(1)   # reduction step within a slice -- arbitrary axis

    @pl.when(j == 0)
    def _init():
        acc_ref[...] = jnp.zeros_like(acc_ref)

    d = x_ref[...].astype(jnp.float32) - y_ref[...].astype(jnp.float32)
    v = jnp.sqrt(d * d + jnp.float32(eps * eps))

    # Global row offset this tile was *meant* to cover.  (The index_map clamps
    # fully out-of-range block indices, but the mask below uses the un-clamped
    # position, so such duplicate tiles contribute exactly zero.)
    base_row = (c * sps + j) * rpt
    fully_valid = base_row + rpt <= total_rows

    @pl.when(fully_valid)
    def _acc_fast():
        # Sublane-aligned split (inner factor 8) is layout-preserving; the sum
        # over the leading axis is a pure VPU add chain into one vreg.
        acc_ref[...] += v.reshape(rpt // 8, 8, LANES).sum(axis=0)

    @pl.when(jnp.logical_not(fully_valid))
    def _acc_masked():
        row_ids = lax.broadcasted_iota(jnp.int32, v.shape, 0)
        vm = jnp.where(base_row + row_ids < total_rows, v, 0.0)
        acc_ref[...] += vm.reshape(rpt // 8, 8, LANES).sum(axis=0)

    @pl.when(j == pl.num_programs(1) - 1)
    def _fin():
        # Tiny (8-row) cross-sublane reduction; (1, 1, 128) lane-dense output.
        o_ref[...] = jnp.sum(acc_ref[...], axis=0, keepdims=True)[None]


def charbonnier_loss(x, y, eps=1e-3):
    """Pallas implementation of CharbonnierLoss.forward (returns f32 scalar)."""
    assert x.shape == y.shape, "x and y must have identical shapes"
    n = x.size
    assert n > 0, "empty input"
    eps = float(eps)
    eps2 = jnp.float32(eps * eps)

    xf = x.reshape(-1)
    yf = y.reshape(-1)

    rows = n // LANES
    n_main = rows * LANES

    # (<128-element) non-lane-aligned tail: fold it with a tiny pure-JAX
    # expression instead of materializing a padded copy of both full inputs.
    # (The prefix slice below is at most one extra pass if XLA does not elide
    # it, and keeps the kernel independent of padding semantics.)
    if n_main < n:
        dt = xf[n_main:].astype(jnp.float32) - yf[n_main:].astype(jnp.float32)
        tail_sum = jnp.sum(jnp.sqrt(dt * dt + eps2))
        xf = xf[:n_main]
        yf = yf[:n_main]
    else:
        tail_sum = jnp.float32(0.0)

    if rows == 0:  # the whole input is the tail
        return tail_sum / jnp.float32(n)

    x2 = xf.reshape(rows, LANES)
    y2 = yf.reshape(rows, LANES)

    # Row-tile size: ~TARGET_TILE_BYTES per input per pipeline buffer, always
    # a multiple of 8 so the in-kernel sublane-aligned tree sum and the
    # (8, 128) block rule both hold (the partial / over-sized last block is
    # handled by the in-kernel row mask).
    itemsize = max(x2.dtype.itemsize, y2.dtype.itemsize)
    rpt_max = max(8, TARGET_TILE_BYTES // (LANES * itemsize))
    rpt = min(rpt_max, _round_up(rows, 8))

    steps_total = _cdiv(rows, rpt)
    num_tc = _tensorcores_per_chip()
    num_slices = 2 if (num_tc >= 2 and steps_total >= 2) else 1
    sps = _cdiv(steps_total, num_slices)   # reduction steps per slice
    last_block = steps_total - 1

    def tile_map(c, j):
        # Clamp: a slice whose coverage runs past the array re-reads the last
        # valid tile; the in-kernel row mask zeroes its contribution.
        return (jnp.minimum(c * sps + j, last_block), 0)

    kernel = functools.partial(
        _charbonnier_kernel, eps=eps, total_rows=rows, rpt=rpt, sps=sps)

    # On v7x force the slice axis onto the two TensorCores; elsewhere the
    # leading axis is size 1 and its semantics are irrelevant.
    lead_sem = pltpu.CORE_PARALLEL if num_slices == 2 else pltpu.PARALLEL
    dim_sem = (lead_sem, pltpu.ARBITRARY)

    partials = pl.pallas_call(
        kernel,
        out_shape=jax.ShapeDtypeStruct((num_slices, 1, LANES), jnp.float32),
        grid_spec=pltpu.PrefetchScalarGridSpec(
            num_scalar_prefetch=0,
            grid=(num_slices, sps),
            in_specs=[
                pl.BlockSpec((rpt, LANES), tile_map),
                pl.BlockSpec((rpt, LANES), tile_map),
            ],
            out_specs=pl.BlockSpec((1, 1, LANES), lambda c, j: (c, 0, 0)),
            scratch_shapes=[pltpu.VMEM((8, LANES), jnp.float32)],
        ),
        compiler_params=pltpu.CompilerParams(dimension_semantics=dim_sem),
    )(x2, y2)

    return (jnp.sum(partials) + tail_sum) / jnp.float32(n)


if __name__ == "__main__":
    key = jax.random.PRNGKey(0)
    kx, ky = jax.random.split(key)

    # NCHW, matching the PyTorch module's conv-style inputs.
    x = jax.random.normal(kx, (2, 4, 16, 16), dtype=jnp.float32)
    y = jax.random.normal(ky, (2, 4, 16, 16), dtype=jnp.float32)
    loss = jax.block_until_ready(charbonnier_loss(x, y, eps=1e-3))
    diff = x - y
    ref = jnp.mean(jnp.sqrt(diff * diff + jnp.float32(1e-3) ** 2))
    assert jnp.allclose(loss, ref, rtol=1e-5, atol=1e-6), (loss, ref)

    # Adversarial shape: element count not a multiple of 128 and row count not
    # a multiple of 8 (exercises the JAX tail fold and the in-kernel row mask).
    kx2, ky2 = jax.random.split(ky)
    x2 = jax.random.normal(kx2, (3, 5, 7, 11), dtype=jnp.float32)
    y2 = jax.random.normal(ky2, (3, 5, 7, 11), dtype=jnp.float32)
    loss2 = jax.block_until_ready(charbonnier_loss(x2, y2, eps=1e-3))
    diff2 = x2 - y2
    ref2 = jnp.mean(jnp.sqrt(diff2 * diff2 + jnp.float32(1e-3) ** 2))
    assert jnp.allclose(loss2, ref2, rtol=1e-5, atol=1e-6), (loss2, ref2)

    print("KERNEL_OK")
</pallas_src>

<mosaic_0001>
module attributes {stable_mosaic.version = 11 : i64} {
  func.func @_charbonnier_kernel(%arg0: i32, %arg1: i32, %arg2: memref<16x128xf32, #tpu.memory_space<vmem>>, %arg3: memref<16x128xf32, #tpu.memory_space<vmem>>, %arg4: memref<1x1x128xf32, #tpu.memory_space<vmem>>, %arg5: memref<8x128xf32, #tpu.memory_space<vmem>>) attributes {dimension_semantics = [#tpu.dimension_semantics<parallel>, #tpu.dimension_semantics<arbitrary>], iteration_bounds = array<i64: 1, 1>, scalar_prefetch = 0 : i64, scratch_operands = 1 : i64, tpu.core_type = #tpu.core_type<tc>, window_params = [{transform_indices = @transform_0, window_bounds = array<i64: 16, 128>}, {transform_indices = @transform_1, window_bounds = array<i64: 16, 128>}, {transform_indices = @transform_2, window_bounds = array<i64: 1, 1, 128>}]} {
    %c0_i32 = arith.constant 0 : i32
    %0 = arith.cmpi eq, %arg1, %c0_i32 : i32
    %1 = arith.extui %0 : i1 to i32
    %c0_i32_0 = arith.constant 0 : i32
    %2 = arith.cmpi ne, %1, %c0_i32_0 : i32
    scf.if %2 {
      %cst_10 = arith.constant 0.000000e+00 : f32
      %23 = vector.broadcast %cst_10 : f32 to vector<8x128xf32>
      %c0_11 = arith.constant 0 : index
      %c0_12 = arith.constant 0 : index
      %24 = vector.load %arg5[%c0_11, %c0_12] : memref<8x128xf32, #tpu.memory_space<vmem>>, vector<8x128xf32>
      tpu.vector_store %arg5[%c0_11, %c0_12], %23 {strides = array<i32>} : memref<8x128xf32, #tpu.memory_space<vmem>>, vector<8x128xf32>,
    } else {
    }
    %c0 = arith.constant 0 : index
    %c0_1 = arith.constant 0 : index
    %3 = vector.load %arg2[%c0, %c0_1] : memref<16x128xf32, #tpu.memory_space<vmem>>, vector<16x128xf32>
    %c0_2 = arith.constant 0 : index
    %c0_3 = arith.constant 0 : index
    %4 = vector.load %arg3[%c0_2, %c0_3] : memref<16x128xf32, #tpu.memory_space<vmem>>, vector<16x128xf32>
    %5 = arith.subf %3, %4 : vector<16x128xf32>
    %6 = arith.mulf %5, %5 : vector<16x128xf32>
    %cst = arith.constant 9.99999997E-7 : f32
    %7 = vector.broadcast %cst : f32 to vector<16x128xf32>
    %8 = arith.addf %6, %7 : vector<16x128xf32>
    %9 = math.sqrt %8 : vector<16x128xf32>
    %c1_i32 = arith.constant 1 : i32
    %10 = arith.muli %arg0, %c1_i32 : i32
    %11 = arith.addi %10, %arg1 : i32
    %c16_i32 = arith.constant 16 : i32
    %12 = arith.muli %11, %c16_i32 : i32
    %c16_i32_4 = arith.constant 16 : i32
    %13 = arith.addi %12, %c16_i32_4 : i32
    %c16_i32_5 = arith.constant 16 : i32
    %14 = arith.cmpi sle, %13, %c16_i32_5 : i32
    %15 = arith.extui %14 : i1 to i32
    %c0_i32_6 = arith.constant 0 : i32
    %16 = arith.cmpi ne, %15, %c0_i32_6 : i32
    scf.if %16 {
      %c0_10 = arith.constant 0 : index
      %c0_11 = arith.constant 0 : index
      %23 = vector.load %arg5[%c0_10, %c0_11] : memref<8x128xf32, #tpu.memory_space<vmem>>, vector<8x128xf32>
      %24 = vector.shape_cast %9 : vector<16x128xf32> to vector<2x8x128xf32>
      %cst_12 = arith.constant dense<0.000000e+00> : vector<8x128xf32>
      %25 = vector.multi_reduction <add>, %24, %cst_12 [0] : vector<2x8x128xf32> to vector<8x128xf32>
      %26 = arith.addf %23, %25 : vector<8x128xf32>
      %c0_13 = arith.constant 0 : index
      %c0_14 = arith.constant 0 : index
      %27 = vector.load %arg5[%c0_13, %c0_14] : memref<8x128xf32, #tpu.memory_space<vmem>>, vector<8x128xf32>
      tpu.vector_store %arg5[%c0_13, %c0_14], %26 {strides = array<i32>} : memref<8x128xf32, #tpu.memory_space<vmem>>, vector<8x128xf32>,
    } else {
    }
    %true = arith.constant true
    %17 = arith.xori %14, %true : i1
    %18 = arith.extui %17 : i1 to i32
    %c0_i32_7 = arith.constant 0 : i32
    %19 = arith.cmpi ne, %18, %c0_i32_7 : i32
    scf.if %19 {
      %23 = tpu.iota {dimensions = array<i32: 0>} : vector<16x128xi32>
      %24 = vector.broadcast %12 : i32 to vector<16x128xi32>
      %25 = arith.addi %24, %23 : vector<16x128xi32>
      %c16_i32_10 = arith.constant 16 : i32
      %26 = vector.broadcast %c16_i32_10 : i32 to vector<16x128xi32>
      %27 = arith.cmpi slt, %25, %26 : vector<16x128xi32>
      %cst_11 = arith.constant 0.000000e+00 : f32
      %28 = vector.broadcast %cst_11 : f32 to vector<16x128xf32>
      %29 = arith.select %27, %9, %28 : vector<16x128xi1>, vector<16x128xf32>
      %c0_12 = arith.constant 0 : index
      %c0_13 = arith.constant 0 : index
      %30 = vector.load %arg5[%c0_12, %c0_13] : memref<8x128xf32, #tpu.memory_space<vmem>>, vector<8x128xf32>
      %31 = vector.shape_cast %29 : vector<16x128xf32> to vector<2x8x128xf32>
      %cst_14 = arith.constant dense<0.000000e+00> : vector<8x128xf32>
      %32 = vector.multi_reduction <add>, %31, %cst_14 [0] : vector<2x8x128xf32> to vector<8x128xf32>
      %33 = arith.addf %30, %32 : vector<8x128xf32>
      %c0_15 = arith.constant 0 : index
      %c0_16 = arith.constant 0 : index
      %34 = vector.load %arg5[%c0_15, %c0_16] : memref<8x128xf32, #tpu.memory_space<vmem>>, vector<8x128xf32>
      tpu.vector_store %arg5[%c0_15, %c0_16], %33 {strides = array<i32>} : memref<8x128xf32, #tpu.memory_space<vmem>>, vector<8x128xf32>,
    } else {
    }
    %c0_i32_8 = arith.constant 0 : i32
    %20 = arith.cmpi eq, %arg1, %c0_i32_8 : i32
    %21 = arith.extui %20 : i1 to i32
    %c0_i32_9 = arith.constant 0 : i32
    %22 = arith.cmpi ne, %21, %c0_i32_9 : i32
    scf.if %22 {
      %c0_10 = arith.constant 0 : index
      %c0_11 = arith.constant 0 : index
      %23 = vector.load %arg5[%c0_10, %c0_11] : memref<8x128xf32, #tpu.memory_space<vmem>>, vector<8x128xf32>
      %cst_12 = arith.constant dense<0.000000e+00> : vector<128xf32>
      %24 = vector.multi_reduction <add>, %23, %cst_12 [0] : vector<8x128xf32> to vector<128xf32>
      %25 = vector.shape_cast %24 : vector<128xf32> to vector<1x128xf32>
      %26 = vector.shape_cast %25 : vector<1x128xf32> to vector<1x1x128xf32>
      %c0_13 = arith.constant 0 : index
      %c0_14 = arith.constant 0 : index
      %c0_15 = arith.constant 0 : index
      %27 = vector.load %arg4[%c0_13, %c0_14, %c0_15] : memref<1x1x128xf32, #tpu.memory_space<vmem>>, vector<1x1x128xf32>
      tpu.vector_store %arg4[%c0_13, %c0_14, %c0_15], %26 {strides = array<i32>} : memref<1x1x128xf32, #tpu.memory_space<vmem>>, vector<1x1x128xf32>,
    } else {
    }
    return
  }
  func.func @transform_0(%arg0: i32, %arg1: i32) -> (i32, i32) {
    %c1_i32 = arith.constant 1 : i32
    %0 = arith.muli %arg0, %c1_i32 : i32
    %1 = arith.addi %0, %arg1 : i32
    %c0_i32 = arith.constant 0 : i32
    %2 = arith.minsi %1, %c0_i32 : i32
    %c0_i32_0 = arith.constant 0 : i32
    %c0_i32_1 = arith.constant 0 : i32
    return %2, %c0_i32_0 : i32, i32
  }
  func.func @transform_1(%arg0: i32, %arg1: i32) -> (i32, i32) {
    %c1_i32 = arith.constant 1 : i32
    %0 = arith.muli %arg0, %c1_i32 : i32
    %1 = arith.addi %0, %arg1 : i32
    %c0_i32 = arith.constant 0 : i32
    %2 = arith.minsi %1, %c0_i32 : i32
    %c0_i32_0 = arith.constant 0 : i32
    %c0_i32_1 = arith.constant 0 : i32
    return %2, %c0_i32_0 : i32, i32
  }
  func.func @transform_2(%arg0: i32, %arg1: i32) -> (i32, i32, i32) {
    %c0_i32 = arith.constant 0 : i32
    %c0_i32_0 = arith.constant 0 : i32
    %c0_i32_1 = arith.constant 0 : i32
    return %arg0, %c0_i32, %c0_i32_0 : i32, i32, i32
  }
}

</mosaic_0001>

<llo_original>
// kernel: tpu_custom_call.1
$region0: #{tpu_custom_call.1}
  #allocation0 [shape = 'u32[]', space=smem, size = 0x4, offset = 0x4, fixed_abs, tag = 'smem constant byte address 0x4 - core index']
  #allocation1 [shape = 'u32[72,128]{1,0:T(1,128)}', space=vmem, size = 0x9000, scoped, tag = 'internal scratch']
  #allocation2 [shape = 'f32[8,128]{1,0:T(8,128)}', space=vmem, size = 0x1000, scoped, tag = 'scratch operand']
  %s0 = inlined_call_operand.hbm [shape: f32[16,128], index: 0, kind: input, shape index: {}]
  %s1 = inlined_call_operand.hbm [shape: f32[16,128], index: 1, kind: input, shape index: {}]
  %s2 = inlined_call_operand.hbm [shape: f32[1,1,128], index: 2, kind: output, shape index: {}]
  %s3 = sld [smem:[#allocation0]]
  $region42: #{tpu_custom_call.1} parent=0
    _
  %s5 = ssub.s32 1, %s3
  %s6 = scalar_select 0, %s5, %s3
  $region1: #{tpu_custom_call.1} parent=0
    #allocation3 [shape = 'u8[8192]{0}', space=vmem, size = 0x2000, scoped, tag = 'input window, operand 0, single buffered']
    #allocation4 [shape = 's32[1]{0}', space=sflag, size = 0x4, scoped, tag = 'scoped memory for tpu_custom_call.1']
    #allocation5 [shape = 's32[1]{0}', space=sflag, size = 0x4, scoped, tag = 'scoped memory for tpu_custom_call.1']
    #allocation6 [shape = 'u8[8192]{0}', space=vmem, size = 0x2000, scoped, tag = 'input window, operand 1, single buffered']
    #allocation7 [shape = 's32[1]{0}', space=sflag, size = 0x4, scoped, tag = 'scoped memory for tpu_custom_call.1']
    #allocation8 [shape = 'u8[512]{0}', space=vmem, size = 0x400, scoped, tag = 'output window, operand 0, single buffered']
    %7 = vsyncpa [#allocation4], 0
    %8 = vsyncpa [#allocation7], 0
    %9 = vsyncpa [#allocation5], 0
    // Predicated region
    $region2: #{tpu_custom_call.1} parent=1 // pred_check
      _
    $region3: #{tpu_custom_call.1} parent=1 // pred_check_branch
      %11 = sbr.rel (0) target = $region5
    $region4: #{tpu_custom_call.1} parent=1 // pred_region
      %s12 = sadd.s32 0, 0
      %p13 = scmp.lt.s32.totalorder %s12, 0
      %s14 = scalar_select %p13, %s12, 0
      %s15 = smul.u32 2, %s14
      %17 = vsyncadd [#allocation4], 0
      %s18 = smul.addr %s15, 8
      %s19 = scalar_lea.hbm %s0, %s18
      %s20 = sshll.u32 %s19, 4
      %s21 = int_to_ptr.hbm [resolvable:$true] %s20
      %s22 = sshll.u32 [#allocation3], 4
      %s23 = int_to_ptr.vmem [resolvable:$true] %s22
      %28 = dma.hbm_to_vmem [thread:$0]  %s21, 256, %s23, [#allocation4], 128, 128, 8
    $region5: #{tpu_custom_call.1} parent=1 // pred_fallthru
      _
    // Predicated region
    $region6: #{tpu_custom_call.1} parent=1 // pred_check
      _
    $region7: #{tpu_custom_call.1} parent=1 // pred_check_branch
      %30 = sbr.rel (0) target = $region9
    $region8: #{tpu_custom_call.1} parent=1 // pred_region
      %s31 = sadd.s32 0, 0
      %p32 = scmp.lt.s32.totalorder %s31, 0
      %s33 = scalar_select %p32, %s31, 0
      %s34 = smul.u32 2, %s33
      %36 = vsyncadd [#allocation7], 0
      %s37 = smul.addr %s34, 8
      %s38 = scalar_lea.hbm %s1, %s37
      %s39 = sshll.u32 %s38, 4
      %s40 = int_to_ptr.hbm [resolvable:$true] %s39
      %s41 = sshll.u32 [#allocation6], 4
      %s42 = int_to_ptr.vmem [resolvable:$true] %s41
      %47 = dma.hbm_to_vmem [thread:$0]  %s40, 256, %s42, [#allocation7], 128, 128, 8
    $region9: #{tpu_custom_call.1} parent=1 // pred_fallthru
      _
    // Predicated region
    $region10: #{tpu_custom_call.1} parent=1 // pred_check
      _
    $region11: #{tpu_custom_call.1} parent=1 // pred_check_branch
      %49 = sbr.rel (0) target = $region13
    $region12: #{tpu_custom_call.1} parent=1 // pred_region
      %51 = dma.done [#allocation4], 256
    $region13: #{tpu_custom_call.1} parent=1 // pred_fallthru
      _
    // Predicated region
    $region14: #{tpu_custom_call.1} parent=1 // pred_check
      _
    $region15: #{tpu_custom_call.1} parent=1 // pred_check_branch
      %53 = sbr.rel (0) target = $region17
    $region16: #{tpu_custom_call.1} parent=1 // pred_region
      %55 = dma.done [#allocation7], 256
    $region17: #{tpu_custom_call.1} parent=1 // pred_fallthru
      _
    %s56 = sadd.s32 0, 0
    %p57 = scmp.lt.s32.totalorder %s56, 0
    %s58 = scalar_select %p57, %s56, 0
    %s59 = smul.u32 2, %s58
    %s60 = sadd.s32 0, 0
    %p61 = scmp.lt.s32.totalorder %s60, 0
    %s62 = scalar_select %p61, %s60, 0
    %s63 = smul.u32 2, %s62
    %p64 = scmp.eq.s32.totalorder 0, 0
    // Predicated region
    $region18: #{tpu_custom_call.1} parent=1 // pred_check
      %p65 = pneg %p64
    $region19: #{tpu_custom_call.1} parent=1 // pred_check_branch
      %67 = sbr.rel (%p65) target = $region21
    $region20: #{tpu_custom_call.1} parent=1 // pred_region
      %68 = vst [vmem:[#allocation2] sm:$0xff] 0.0
    $region21: #{tpu_custom_call.1} parent=1 // pred_fallthru
      _
    %v69 = vld [vmem:[#allocation3] sm:$0xff]
    %v70 = vld [vmem:[#allocation3 + $0x8] sm:$0xff]
    %v71 = vld [vmem:[#allocation6] sm:$0xff]
    %v72 = vld [vmem:[#allocation6 + $0x8] sm:$0xff]
    %v73 = vsub.f32 %v69, %v71
    %v74 = vsub.f32 %v70, %v72
    %v75 = vmul.f32 %v73, %v73
    %v76 = vmul.f32 %v74, %v74
    %v77 = vadd.f32 %v75, 1e-06
    %v78 = vadd.f32 %v76, 1e-06
    %v79 = vrsqrt.pop %v77
    %v80 = vmul.f32 %v79, %v77
    %v81 = vmul.f32 %v80, %v79
    %v82 = vmul.f32 0.5, %v81
    %v83 = vsub.f32 1.5, %v82
    %v84 = vmul.f32 %v79, %v83
    %v85 = vmul.f32 %v77, %v84
    %vm86 = vcmp.eq.f32.partialorder %v77, inf
    %v87 = vsel %vm86, %v77, %v85
    %vm88 = vcmp.eq.f32.partialorder %v77, 0.0
    %v89 = vand.u32 %v77, 2147483648
    %v90 = vsel %vm88, %v89, %v87
    %v91 = vrsqrt.pop %v78
    %v92 = vmul.f32 %v91, %v78
    %v93 = vmul.f32 %v92, %v91
    %v94 = vmul.f32 0.5, %v93
    %v95 = vsub.f32 1.5, %v94
    %v96 = vmul.f32 %v91, %v95
    %v97 = vmul.f32 %v78, %v96
    %vm98 = vcmp.eq.f32.partialorder %v78, inf
    %v99 = vsel %vm98, %v78, %v97
    %vm100 = vcmp.eq.f32.partialorder %v78, 0.0
    %v101 = vand.u32 %v78, 2147483648
    %v102 = vsel %vm100, %v101, %v99
    %s103 = sadd.s32 0, 0
    %s104 = smul.u32 %s103, 16
    %s105 = sadd.s32 %s104, 16
    %p106 = scmp.le.s32.totalorder %s105, 16
    // Predicated region
    $region22: #{tpu_custom_call.1} parent=1 // pred_check
      %p107 = pneg %p106
    $region23: #{tpu_custom_call.1} parent=1 // pred_check_branch
      %109 = sbr.rel (%p107) target = $region25
    $region24: #{tpu_custom_call.1} parent=1 // pred_region
      %v110 = vld [vmem:[#allocation2] sm:$0xff]
      %v111 = vadd.f32 %v90, %v102
      %v112 = vadd.f32 %v110, %v111
      %113 = vst [vmem:[#allocation2] sm:$0xff] %v112
    $region25: #{tpu_custom_call.1} parent=1 // pred_fallthru
      _
    %p114 = scmp.gt.s32.totalorder %s105, 16
    // Predicated region
    $region26: #{tpu_custom_call.1} parent=1 // pred_check
      %p115 = pneg %p114
    $region27: #{tpu_custom_call.1} parent=1 // pred_check_branch
      %117 = sbr.rel (%p115) target = $region29
    $region28: #{tpu_custom_call.1} parent=1 // pred_region
      %v118 = vlaneseq
      %v119 = vshrl.u32 %v118, 7
      %v120 = vadd.s32 %v119, 8
      %v121 = vstv %s104
      %v122 = vadd.s32 %v121, %v119
      %v123 = vadd.s32 %v121, %v120
      %vm124 = vcmp.lt.s32.totalorder %v122, 16
      %vm125 = vcmp.lt.s32.totalorder %v123, 16
      %v126 = vsel %vm124, %v90, 0.0
      %v127 = vsel %vm125, %v102, 0.0
      %v128 = vld [vmem:[#allocation2] sm:$0xff]
      %v129 = vadd.f32 %v126, %v127
      %v130 = vadd.f32 %v128, %v129
      %131 = vst [vmem:[#allocation2] sm:$0xff] %v130
    $region29: #{tpu_custom_call.1} parent=1 // pred_fallthru
      _
    // Predicated region
    $region30: #{tpu_custom_call.1} parent=1 // pred_check
      %p132 = pneg %p64
    $region31: #{tpu_custom_call.1} parent=1 // pred_check_branch
      %134 = sbr.rel (%p132) target = $region33
    $region32: #{tpu_custom_call.1} parent=1 // pred_region
      %v135 = vld [vmem:[#allocation2] sm:$0xff]
      %v136 = vrot.slane %v135, 4
      %v137 = vadd.f32 %v135, %v136
      %v138 = vrot.slane %v137, 2
      %v139 = vadd.f32 %v137, %v138
      %v140 = vrot.slane %v139, 1
      %v141 = vadd.f32 %v139, %v140
      %142 = vst [vmem:[#allocation8] sm:$0x1] %v141
    $region33: #{tpu_custom_call.1} parent=1 // pred_fallthru
      _
    // Predicated region
    $region34: #{tpu_custom_call.1} parent=1 // pred_check
      _
    $region35: #{tpu_custom_call.1} parent=1 // pred_check_branch
      %144 = sbr.rel (0) target = $region37
    $region36: #{tpu_custom_call.1} parent=1 // pred_region
      %146 = vsyncadd [#allocation5], 0
      %s148 = sshll.u32 [#allocation8], 4
      %s149 = int_to_ptr.vmem [resolvable:$true] %s148
      %s150 = sshll.u32 %s2, 4
      %s151 = int_to_ptr.hbm [resolvable:$true] %s150
      %153 = dma.vmem_to_hbm [thread:$0]  %s149, 16, %s151, [#allocation5]
    $region37: #{tpu_custom_call.1} parent=1 // pred_fallthru
      _
    // Predicated region
    $region38: #{tpu_custom_call.1} parent=1 // pred_check
      _
    $region39: #{tpu_custom_call.1} parent=1 // pred_check_branch
      %155 = sbr.rel (0) target = $region41
    $region40: #{tpu_custom_call.1} parent=1 // pred_region
      %157 = dma.done [#allocation5], 16
    $region41: #{tpu_custom_call.1} parent=1 // pred_fallthru
      _
    %158 = vsyncpa [#allocation4], 1
    %159 = vsyncpa [#allocation7], 1
    %160 = vsyncpa [#allocation5], 1

</llo_original>
